<compile_context>
chip_gen: v5e
topology: v5e:2x2
jax: 0.10.0
libtpu: 0.0.40
codegen_flags: <defaults>
</compile_context>

<pallas_src>
import jax
import jax.numpy as jnp
from jax import lax
from jax.experimental import pallas as pl
from jax.experimental.pallas import tpu as pltpu

_LANES = 128
_NEG = -1.0e30          # finite "-inf": exp() stays well-defined (no inf-inf NaNs)
_NUM_CORES = 2          # leading "parallel" grid axis (both TCs on v7x)


def _round_up(x: int, mult: int) -> int:
    return ((x + mult - 1) // mult) * mult


def _prep_stream(x: jax.Array, block_rows_target: int):
    """Flatten + minimally pad a similarity vector into a lane-dense 2-D view."""
    x = x.reshape(-1)
    n = int(x.shape[0])
    itemsize = jnp.dtype(x.dtype).itemsize
    gran = max(8, 32 // max(1, itemsize))            # sublanes/tile: f32->8, bf16->16
    rows = max(1, pl.cdiv(n, _LANES))
    rows_padded = _round_up(rows, gran)
    block_rows = min(_round_up(block_rows_target, gran), rows_padded)
    pad = rows_padded * _LANES - n
    if pad:
        x = jnp.pad(x, (0, pad))                     # at most gran*128-1 elements
    x2d = x.reshape(rows_padded, _LANES)
    chunks = pl.cdiv(rows_padded, block_rows)        # partial last block allowed
    needs_mask = (chunks * block_rows * _LANES) != n
    return x2d, n, block_rows, chunks, needs_mask


def _make_stream_update(block_rows: int, chunks: int, n_valid: int, logit_fn):
    """Per-chunk online-LSE update feeding a small (8,128) accumulator pair."""
    groups = block_rows // 8
    last_row0 = (chunks - 1) * block_rows
    full_rows, rem = divmod(n_valid, _LANES)

    def update(x_ref, m_ref, s_ref, masked: bool):
        x = x_ref[...].astype(jnp.float32)           # cast in-kernel only
        logits = logit_fn(x)                         # (block_rows, 128)
        if masked:
            # Static boundary mask; this branch is only taken for the final chunk.
            grow = last_row0 + lax.broadcasted_iota(
                jnp.int32, (block_rows, _LANES), 0)
            valid = grow < full_rows
            if rem:
                col = lax.broadcasted_iota(jnp.int32, (block_rows, _LANES), 1)
                valid = jnp.logical_or(
                    valid, jnp.logical_and(grow == full_rows, col < rem))
            logits = jnp.where(valid, logits, _NEG)
        # Block-local fold to (8,128): cross-vreg VPU max/add, one exp/element.
        l3 = logits.reshape(groups, 8, _LANES)
        m_blk = jnp.max(l3, axis=0)                                  # (8,128)
        s_blk = jnp.sum(jnp.exp(l3 - m_blk[None, :, :]), axis=0)     # (8,128)
        # Merge into the small running accumulator (two tiny exps per step).
        m_old = m_ref[0]
        m_new = jnp.maximum(m_old, m_blk)
        s_ref[0] = s_ref[0] * jnp.exp(m_old - m_new) + s_blk * jnp.exp(m_blk - m_new)
        m_ref[0] = m_new

    return update


def _make_kernel(upd_p, upd_n, meta_p, meta_n):
    chunks_p, cpc_p, mask_p = meta_p
    chunks_n, cpc_n, mask_n = meta_n

    def run_stream(c, i, x_ref, m_ref, s_ref, upd, chunks, cpc, needs_mask):
        chunk = c * cpc + i                 # global chunk index for this stream
        in_core = i < cpc                   # guards phantom / out-of-range steps
        if needs_mask:
            if chunks > 1:
                @pl.when(jnp.logical_and(in_core, chunk < chunks - 1))
                def _steady():
                    upd(x_ref, m_ref, s_ref, masked=False)

            @pl.when(jnp.logical_and(in_core, chunk == chunks - 1))
            def _tail():
                upd(x_ref, m_ref, s_ref, masked=True)
        else:
            @pl.when(jnp.logical_and(in_core, chunk < chunks))
            def _all():
                upd(x_ref, m_ref, s_ref, masked=False)

    def kernel(p_ref, n_ref, pm_ref, ps_ref, nm_ref, ns_ref):
        c = pl.program_id(0)
        i = pl.program_id(1)

        @pl.when(i == 0)
        def _init():
            pm_ref[...] = jnp.full(pm_ref.shape, _NEG, jnp.float32)
            ps_ref[...] = jnp.zeros(ps_ref.shape, jnp.float32)
            nm_ref[...] = jnp.full(nm_ref.shape, _NEG, jnp.float32)
            ns_ref[...] = jnp.zeros(ns_ref.shape, jnp.float32)

        run_stream(c, i, p_ref, pm_ref, ps_ref, upd_p, chunks_p, cpc_p, mask_p)
        run_stream(c, i, n_ref, nm_ref, ns_ref, upd_n, chunks_n, cpc_n, mask_n)

    return kernel


def _fused_circle_lse(sp, sn, logit_p_fn, logit_n_fn, block_rows_target):
    p2d, n_p, br_p, chunks_p, mask_p = _prep_stream(sp, block_rows_target)
    n2d, n_n, br_n, chunks_n, mask_n = _prep_stream(sn, block_rows_target)

    cpc_p = pl.cdiv(chunks_p, _NUM_CORES)    # chunks per "core" for each stream
    cpc_n = pl.cdiv(chunks_n, _NUM_CORES)
    inner = max(cpc_p, cpc_n)

    upd_p = _make_stream_update(br_p, chunks_p, n_p, logit_p_fn)
    upd_n = _make_stream_update(br_n, chunks_n, n_n, logit_n_fn)
    kernel = _make_kernel(upd_p, upd_n,
                          (chunks_p, cpc_p, mask_p),
                          (chunks_n, cpc_n, mask_n))

    def p_map(c, i):  # clamp phantom steps onto the last valid block (guarded in-kernel)
        return (jnp.minimum(c * cpc_p + i, chunks_p - 1), 0)

    def n_map(c, i):
        return (jnp.minimum(c * cpc_n + i, chunks_n - 1), 0)

    part_spec = pl.BlockSpec((1, 8, _LANES), lambda c, i: (c, 0, 0))
    part_shape = jax.ShapeDtypeStruct((_NUM_CORES, 8, _LANES), jnp.float32)

    pm, ps, nm, ns = pl.pallas_call(
        kernel,
        grid=(_NUM_CORES, inner),
        in_specs=[pl.BlockSpec((br_p, _LANES), p_map),
                  pl.BlockSpec((br_n, _LANES), n_map)],
        out_specs=[part_spec, part_spec, part_spec, part_spec],
        out_shape=[part_shape, part_shape, part_shape, part_shape],
        compiler_params=pltpu.CompilerParams(
            dimension_semantics=("parallel", "arbitrary"),
            vmem_limit_bytes=32 * 1024 * 1024),
    )(p2d, n2d)

    def combine(m_part, s_part):                     # tiny epilogue on (2,8,128)
        m_max = jnp.max(m_part)
        total = jnp.sum(s_part * jnp.exp(m_part - m_max))
        return m_max + jnp.log(total)

    return combine(pm, ps), combine(nm, ns)


def _circle_loss_ref(sp, sn, m, gamma):
    """Pure-JAX reference (and fast path for tiny inputs)."""
    sp = sp.astype(jnp.float32)
    sn = sn.astype(jnp.float32)
    ap = jnp.maximum(-sp + 1.0 + m, 0.0)
    an = jnp.maximum(sn + m, 0.0)
    logit_p = -ap * (sp - (1.0 - m)) * gamma
    logit_n = an * (sn - m) * gamma
    x = (jax.scipy.special.logsumexp(logit_n)
         + jax.scipy.special.logsumexp(logit_p))
    return jax.nn.softplus(x)


def circle_loss(sp: jax.Array, sn: jax.Array, m: float, gamma: float, *,
                use_pallas=None, min_pallas_elems: int = 262144,
                block_rows_target: int = 2048) -> jax.Array:
    """CircleLoss.forward: sp [Np] positive sims, sn [Nn] negative sims -> scalar."""
    sp = jnp.asarray(sp).reshape(-1)
    sn = jnp.asarray(sn).reshape(-1)
    m = float(m)
    gamma = float(gamma)

    if use_pallas is None:
        use_pallas = (sp.shape[0] + sn.shape[0]) >= min_pallas_elems
    if not use_pallas:
        return _circle_loss_ref(sp, sn, m, gamma)

    delta_p = 1.0 - m
    delta_n = m

    def logit_p_fn(x):
        ap = jnp.maximum(1.0 + m - x, 0.0)
        return ap * ((delta_p - x) * gamma)      # == -ap * (x - delta_p) * gamma

    def logit_n_fn(x):
        an = jnp.maximum(x + m, 0.0)
        return an * ((x - delta_n) * gamma)

    lse_p, lse_n = _fused_circle_lse(sp, sn, logit_p_fn, logit_n_fn,
                                     block_rows_target)
    x = lse_n + lse_p
    # numerically-stable softplus (scalar epilogue; XLA fuses it)
    return jnp.maximum(x, 0.0) + jnp.log1p(jnp.exp(-jnp.abs(x)))


if __name__ == "__main__":
    m = 0.25
    gamma = 64.0

    key = jax.random.PRNGKey(0)
    kp, kn, kp2, kn2 = jax.random.split(key, 4)

    # --- small vectors: single chunk per stream, exercises padding + mask path
    sp = jax.random.uniform(kp, (300,), jnp.float32, -1.0, 1.0)
    sn = jax.random.uniform(kn, (517,), jnp.float32, -1.0, 1.0)
    loss = jax.block_until_ready(circle_loss(sp, sn, m, gamma, use_pallas=True))
    ref = _circle_loss_ref(sp, sn, m, gamma)
    assert jnp.allclose(loss, ref, rtol=1e-5, atol=1e-4), (loss, ref)

    # --- larger vectors with a small block target: multi-chunk grid, both
    #     "cores", phantom-chunk guards and masked final chunk of each stream
    sp_l = jax.random.uniform(kp2, (40000,), jnp.float32, -1.0, 1.0)
    sn_l = jax.random.uniform(kn2, (70000,), jnp.float32, -1.0, 1.0)
    ref_l = _circle_loss_ref(sp_l, sn_l, m, gamma)
    loss_l = jax.block_until_ready(
        circle_loss(sp_l, sn_l, m, gamma, use_pallas=True, block_rows_target=64))
    assert jnp.allclose(loss_l, ref_l, rtol=2e-4, atol=1e-3), (loss_l, ref_l)

    # --- same data, default (large) blocks
    loss_l2 = jax.block_until_ready(circle_loss(sp_l, sn_l, m, gamma, use_pallas=True))
    assert jnp.allclose(loss_l2, ref_l, rtol=2e-4, atol=1e-3), (loss_l2, ref_l)

    # --- bf16 inputs travel in native dtype; f32 cast happens in-kernel
    sp_bf, sn_bf = sp.astype(jnp.bfloat16), sn.astype(jnp.bfloat16)
    loss_bf = jax.block_until_ready(circle_loss(sp_bf, sn_bf, m, gamma, use_pallas=True))
    ref_bf = _circle_loss_ref(sp_bf, sn_bf, m, gamma)
    assert jnp.allclose(loss_bf, ref_bf, rtol=2e-4, atol=1e-3), (loss_bf, ref_bf)

    # --- tiny inputs: size-dispatch falls back to the fused XLA path
    loss_s = jax.block_until_ready(circle_loss(sp[:16], sn[:32], m, gamma))
    ref_s = _circle_loss_ref(sp[:16], sn[:32], m, gamma)
    assert jnp.allclose(loss_s, ref_s, rtol=1e-5, atol=1e-5), (loss_s, ref_s)

    print("KERNEL_OK")
</pallas_src>

<mosaic_0001>
module attributes {stable_mosaic.version = 11 : i64} {
  func.func @kernel(%arg0: i32, %arg1: i32, %arg2: memref<8x128xf32, #tpu.memory_space<vmem>>, %arg3: memref<8x128xf32, #tpu.memory_space<vmem>>, %arg4: memref<1x8x128xf32, #tpu.memory_space<vmem>>, %arg5: memref<1x8x128xf32, #tpu.memory_space<vmem>>, %arg6: memref<1x8x128xf32, #tpu.memory_space<vmem>>, %arg7: memref<1x8x128xf32, #tpu.memory_space<vmem>>) attributes {dimension_semantics = [#tpu.dimension_semantics<parallel>, #tpu.dimension_semantics<arbitrary>], iteration_bounds = array<i64: 2, 1>, scalar_prefetch = 0 : i64, scratch_operands = 0 : i64, tpu.core_type = #tpu.core_type<tc>, window_params = [{transform_indices = @transform_0, window_bounds = array<i64: 8, 128>}, {transform_indices = @transform_1, window_bounds = array<i64: 8, 128>}, {transform_indices = @transform_2, window_bounds = array<i64: 1, 8, 128>}, {transform_indices = @transform_3, window_bounds = array<i64: 1, 8, 128>}, {transform_indices = @transform_4, window_bounds = array<i64: 1, 8, 128>}, {transform_indices = @transform_5, window_bounds = array<i64: 1, 8, 128>}]} {
    %c0_i32 = arith.constant 0 : i32
    %0 = arith.cmpi eq, %arg1, %c0_i32 : i32
    %1 = arith.extui %0 : i1 to i32
    %c0_i32_0 = arith.constant 0 : i32
    %2 = arith.cmpi ne, %1, %c0_i32_0 : i32
    scf.if %2 {
      %cst = arith.constant -1.000000e+30 : f32
      %17 = vector.broadcast %cst : f32 to vector<1x8x128xf32>
      %c0 = arith.constant 0 : index
      %c0_8 = arith.constant 0 : index
      %c0_9 = arith.constant 0 : index
      %18 = vector.load %arg4[%c0, %c0_8, %c0_9] : memref<1x8x128xf32, #tpu.memory_space<vmem>>, vector<1x8x128xf32>
      tpu.vector_store %arg4[%c0, %c0_8, %c0_9], %17 {strides = array<i32>} : memref<1x8x128xf32, #tpu.memory_space<vmem>>, vector<1x8x128xf32>,
      %cst_10 = arith.constant 0.000000e+00 : f32
      %19 = vector.broadcast %cst_10 : f32 to vector<1x8x128xf32>
      %c0_11 = arith.constant 0 : index
      %c0_12 = arith.constant 0 : index
      %c0_13 = arith.constant 0 : index
      %20 = vector.load %arg5[%c0_11, %c0_12, %c0_13] : memref<1x8x128xf32, #tpu.memory_space<vmem>>, vector<1x8x128xf32>
      tpu.vector_store %arg5[%c0_11, %c0_12, %c0_13], %19 {strides = array<i32>} : memref<1x8x128xf32, #tpu.memory_space<vmem>>, vector<1x8x128xf32>,
      %cst_14 = arith.constant -1.000000e+30 : f32
      %21 = vector.broadcast %cst_14 : f32 to vector<1x8x128xf32>
      %c0_15 = arith.constant 0 : index
      %c0_16 = arith.constant 0 : index
      %c0_17 = arith.constant 0 : index
      %22 = vector.load %arg6[%c0_15, %c0_16, %c0_17] : memref<1x8x128xf32, #tpu.memory_space<vmem>>, vector<1x8x128xf32>
      tpu.vector_store %arg6[%c0_15, %c0_16, %c0_17], %21 {strides = array<i32>} : memref<1x8x128xf32, #tpu.memory_space<vmem>>, vector<1x8x128xf32>,
      %cst_18 = arith.constant 0.000000e+00 : f32
      %23 = vector.broadcast %cst_18 : f32 to vector<1x8x128xf32>
      %c0_19 = arith.constant 0 : index
      %c0_20 = arith.constant 0 : index
      %c0_21 = arith.constant 0 : index
      %24 = vector.load %arg7[%c0_19, %c0_20, %c0_21] : memref<1x8x128xf32, #tpu.memory_space<vmem>>, vector<1x8x128xf32>
      tpu.vector_store %arg7[%c0_19, %c0_20, %c0_21], %23 {strides = array<i32>} : memref<1x8x128xf32, #tpu.memory_space<vmem>>, vector<1x8x128xf32>,
    } else {
    }
    %c1_i32 = arith.constant 1 : i32
    %3 = arith.muli %arg0, %c1_i32 : i32
    %4 = arith.addi %3, %arg1 : i32
    %c1_i32_1 = arith.constant 1 : i32
    %5 = arith.cmpi slt, %arg1, %c1_i32_1 : i32
    %c0_i32_2 = arith.constant 0 : i32
    %6 = arith.cmpi eq, %4, %c0_i32_2 : i32
    %7 = arith.andi %5, %6 : i1
    %8 = arith.extui %7 : i1 to i32
    %c0_i32_3 = arith.constant 0 : i32
    %9 = arith.cmpi ne, %8, %c0_i32_3 : i32
    scf.if %9 {
      %c0 = arith.constant 0 : index
      %c0_8 = arith.constant 0 : index
      %17 = vector.load %arg2[%c0, %c0_8] : memref<8x128xf32, #tpu.memory_space<vmem>>, vector<8x128xf32>
      %cst = arith.constant 1.250000e+00 : f32
      %18 = vector.broadcast %cst : f32 to vector<8x128xf32>
      %19 = arith.subf %18, %17 : vector<8x128xf32>
      %cst_9 = arith.constant 0.000000e+00 : f32
      %20 = vector.broadcast %cst_9 : f32 to vector<8x128xf32>
      %21 = arith.maximumf %19, %20 : vector<8x128xf32>
      %cst_10 = arith.constant 7.500000e-01 : f32
      %22 = vector.broadcast %cst_10 : f32 to vector<8x128xf32>
      %23 = arith.subf %22, %17 : vector<8x128xf32>
      %cst_11 = arith.constant 6.400000e+01 : f32
      %24 = vector.broadcast %cst_11 : f32 to vector<8x128xf32>
      %25 = arith.mulf %23, %24 : vector<8x128xf32>
      %26 = arith.mulf %21, %25 : vector<8x128xf32>
      %27 = tpu.iota {dimensions = array<i32: 0>} : vector<8x128xi32>
      %c0_i32_12 = arith.constant 0 : i32
      %28 = vector.broadcast %c0_i32_12 : i32 to vector<8x128xi32>
      %29 = arith.addi %28, %27 : vector<8x128xi32>
      %c2_i32 = arith.constant 2 : i32
      %30 = vector.broadcast %c2_i32 : i32 to vector<8x128xi32>
      %31 = arith.cmpi slt, %29, %30 : vector<8x128xi32>
      %32 = tpu.iota {dimensions = array<i32: 1>} : vector<8x128xi32>
      %c2_i32_13 = arith.constant 2 : i32
      %33 = vector.broadcast %c2_i32_13 : i32 to vector<8x128xi32>
      %34 = arith.cmpi eq, %29, %33 : vector<8x128xi32>
      %c44_i32 = arith.constant 44 : i32
      %35 = vector.broadcast %c44_i32 : i32 to vector<8x128xi32>
      %36 = arith.cmpi slt, %32, %35 : vector<8x128xi32>
      %37 = arith.andi %34, %36 : vector<8x128xi1>
      %38 = arith.ori %31, %37 : vector<8x128xi1>
      %cst_14 = arith.constant -1.000000e+30 : f32
      %39 = vector.broadcast %cst_14 : f32 to vector<8x128xf32>
      %40 = arith.select %38, %26, %39 : vector<8x128xi1>, vector<8x128xf32>
      %41 = vector.shape_cast %40 : vector<8x128xf32> to vector<1x8x128xf32>
      %cst_15 = arith.constant dense<0xFF800000> : vector<8x128xf32>
      %42 = vector.multi_reduction <maximumf>, %41, %cst_15 [0] : vector<1x8x128xf32> to vector<8x128xf32>
      %43 = vector.shape_cast %42 : vector<8x128xf32> to vector<1x8x128xf32>
      %44 = arith.subf %41, %43 : vector<1x8x128xf32>
      %45 = math.exp %44 : vector<1x8x128xf32>
      %cst_16 = arith.constant dense<0.000000e+00> : vector<8x128xf32>
      %46 = vector.multi_reduction <add>, %45, %cst_16 [0] : vector<1x8x128xf32> to vector<8x128xf32>
      %c0_17 = arith.constant 0 : index
      %c0_18 = arith.constant 0 : index
      %c0_19 = arith.constant 0 : index
      %47 = vector.load %arg4[%c0_17, %c0_18, %c0_19] : memref<1x8x128xf32, #tpu.memory_space<vmem>>, vector<1x8x128xf32>
      %48 = vector.shape_cast %47 : vector<1x8x128xf32> to vector<8x128xf32>
      %49 = arith.maximumf %48, %42 : vector<8x128xf32>
      %c0_20 = arith.constant 0 : index
      %c0_21 = arith.constant 0 : index
      %c0_22 = arith.constant 0 : index
      %50 = vector.load %arg5[%c0_20, %c0_21, %c0_22] : memref<1x8x128xf32, #tpu.memory_space<vmem>>, vector<1x8x128xf32>
      %51 = vector.shape_cast %50 : vector<1x8x128xf32> to vector<8x128xf32>
      %52 = arith.subf %48, %49 : vector<8x128xf32>
      %53 = math.exp %52 : vector<8x128xf32>
      %54 = arith.mulf %51, %53 : vector<8x128xf32>
      %55 = arith.subf %42, %49 : vector<8x128xf32>
      %56 = math.exp %55 : vector<8x128xf32>
      %57 = arith.mulf %46, %56 : vector<8x128xf32>
      %58 = arith.addf %54, %57 : vector<8x128xf32>
      %c0_23 = arith.constant 0 : index
      %c0_24 = arith.constant 0 : index
      %c0_25 = arith.constant 0 : index
      %59 = vector.load %arg5[%c0_23, %c0_24, %c0_25] : memref<1x8x128xf32, #tpu.memory_space<vmem>>, vector<1x8x128xf32>
      %60 = vector.shape_cast %59 : vector<1x8x128xf32> to vector<8x128xf32>
      %61 = vector.shape_cast %58 : vector<8x128xf32> to vector<1x8x128xf32>
      tpu.vector_store %arg5[%c0_23, %c0_24, %c0_25], %61 {strides = array<i32>} : memref<1x8x128xf32, #tpu.memory_space<vmem>>, vector<1x8x128xf32>,
      %c0_26 = arith.constant 0 : index
      %c0_27 = arith.constant 0 : index
      %c0_28 = arith.constant 0 : index
      %62 = vector.load %arg4[%c0_26, %c0_27, %c0_28] : memref<1x8x128xf32, #tpu.memory_space<vmem>>, vector<1x8x128xf32>
      %63 = vector.shape_cast %62 : vector<1x8x128xf32> to vector<8x128xf32>
      %64 = vector.shape_cast %49 : vector<8x128xf32> to vector<1x8x128xf32>
      tpu.vector_store %arg4[%c0_26, %c0_27, %c0_28], %64 {strides = array<i32>} : memref<1x8x128xf32, #tpu.memory_space<vmem>>, vector<1x8x128xf32>,
    } else {
    }
    %c1_i32_4 = arith.constant 1 : i32
    %10 = arith.muli %arg0, %c1_i32_4 : i32
    %11 = arith.addi %10, %arg1 : i32
    %c1_i32_5 = arith.constant 1 : i32
    %12 = arith.cmpi slt, %arg1, %c1_i32_5 : i32
    %c0_i32_6 = arith.constant 0 : i32
    %13 = arith.cmpi eq, %11, %c0_i32_6 : i32
    %14 = arith.andi %12, %13 : i1
    %15 = arith.extui %14 : i1 to i32
    %c0_i32_7 = arith.constant 0 : i32
    %16 = arith.cmpi ne, %15, %c0_i32_7 : i32
    scf.if %16 {
      %c0 = arith.constant 0 : index
      %c0_8 = arith.constant 0 : index
      %17 = vector.load %arg3[%c0, %c0_8] : memref<8x128xf32, #tpu.memory_space<vmem>>, vector<8x128xf32>
      %cst = arith.constant 2.500000e-01 : f32
      %18 = vector.broadcast %cst : f32 to vector<8x128xf32>
      %19 = arith.addf %17, %18 : vector<8x128xf32>
      %cst_9 = arith.constant 0.000000e+00 : f32
      %20 = vector.broadcast %cst_9 : f32 to vector<8x128xf32>
      %21 = arith.maximumf %19, %20 : vector<8x128xf32>
      %cst_10 = arith.constant 2.500000e-01 : f32
      %22 = vector.broadcast %cst_10 : f32 to vector<8x128xf32>
      %23 = arith.subf %17, %22 : vector<8x128xf32>
      %cst_11 = arith.constant 6.400000e+01 : f32
      %24 = vector.broadcast %cst_11 : f32 to vector<8x128xf32>
      %25 = arith.mulf %23, %24 : vector<8x128xf32>
      %26 = arith.mulf %21, %25 : vector<8x128xf32>
      %27 = tpu.iota {dimensions = array<i32: 0>} : vector<8x128xi32>
      %c0_i32_12 = arith.constant 0 : i32
      %28 = vector.broadcast %c0_i32_12 : i32 to vector<8x128xi32>
      %29 = arith.addi %28, %27 : vector<8x128xi32>
      %c4_i32 = arith.constant 4 : i32
      %30 = vector.broadcast %c4_i32 : i32 to vector<8x128xi32>
      %31 = arith.cmpi slt, %29, %30 : vector<8x128xi32>
      %32 = tpu.iota {dimensions = array<i32: 1>} : vector<8x128xi32>
      %c4_i32_13 = arith.constant 4 : i32
      %33 = vector.broadcast %c4_i32_13 : i32 to vector<8x128xi32>
      %34 = arith.cmpi eq, %29, %33 : vector<8x128xi32>
      %c5_i32 = arith.constant 5 : i32
      %35 = vector.broadcast %c5_i32 : i32 to vector<8x128xi32>
      %36 = arith.cmpi slt, %32, %35 : vector<8x128xi32>
      %37 = arith.andi %34, %36 : vector<8x128xi1>
      %38 = arith.ori %31, %37 : vector<8x128xi1>
      %cst_14 = arith.constant -1.000000e+30 : f32
      %39 = vector.broadcast %cst_14 : f32 to vector<8x128xf32>
      %40 = arith.select %38, %26, %39 : vector<8x128xi1>, vector<8x128xf32>
      %41 = vector.shape_cast %40 : vector<8x128xf32> to vector<1x8x128xf32>
      %cst_15 = arith.constant dense<0xFF800000> : vector<8x128xf32>
      %42 = vector.multi_reduction <maximumf>, %41, %cst_15 [0] : vector<1x8x128xf32> to vector<8x128xf32>
      %43 = vector.shape_cast %42 : vector<8x128xf32> to vector<1x8x128xf32>
      %44 = arith.subf %41, %43 : vector<1x8x128xf32>
      %45 = math.exp %44 : vector<1x8x128xf32>
      %cst_16 = arith.constant dense<0.000000e+00> : vector<8x128xf32>
      %46 = vector.multi_reduction <add>, %45, %cst_16 [0] : vector<1x8x128xf32> to vector<8x128xf32>
      %c0_17 = arith.constant 0 : index
      %c0_18 = arith.constant 0 : index
      %c0_19 = arith.constant 0 : index
      %47 = vector.load %arg6[%c0_17, %c0_18, %c0_19] : memref<1x8x128xf32, #tpu.memory_space<vmem>>, vector<1x8x128xf32>
      %48 = vector.shape_cast %47 : vector<1x8x128xf32> to vector<8x128xf32>
      %49 = arith.maximumf %48, %42 : vector<8x128xf32>
      %c0_20 = arith.constant 0 : index
      %c0_21 = arith.constant 0 : index
      %c0_22 = arith.constant 0 : index
      %50 = vector.load %arg7[%c0_20, %c0_21, %c0_22] : memref<1x8x128xf32, #tpu.memory_space<vmem>>, vector<1x8x128xf32>
      %51 = vector.shape_cast %50 : vector<1x8x128xf32> to vector<8x128xf32>
      %52 = arith.subf %48, %49 : vector<8x128xf32>
      %53 = math.exp %52 : vector<8x128xf32>
      %54 = arith.mulf %51, %53 : vector<8x128xf32>
      %55 = arith.subf %42, %49 : vector<8x128xf32>
      %56 = math.exp %55 : vector<8x128xf32>
      %57 = arith.mulf %46, %56 : vector<8x128xf32>
      %58 = arith.addf %54, %57 : vector<8x128xf32>
      %c0_23 = arith.constant 0 : index
      %c0_24 = arith.constant 0 : index
      %c0_25 = arith.constant 0 : index
      %59 = vector.load %arg7[%c0_23, %c0_24, %c0_25] : memref<1x8x128xf32, #tpu.memory_space<vmem>>, vector<1x8x128xf32>
      %60 = vector.shape_cast %59 : vector<1x8x128xf32> to vector<8x128xf32>
      %61 = vector.shape_cast %58 : vector<8x128xf32> to vector<1x8x128xf32>
      tpu.vector_store %arg7[%c0_23, %c0_24, %c0_25], %61 {strides = array<i32>} : memref<1x8x128xf32, #tpu.memory_space<vmem>>, vector<1x8x128xf32>,
      %c0_26 = arith.constant 0 : index
      %c0_27 = arith.constant 0 : index
      %c0_28 = arith.constant 0 : index
      %62 = vector.load %arg6[%c0_26, %c0_27, %c0_28] : memref<1x8x128xf32, #tpu.memory_space<vmem>>, vector<1x8x128xf32>
      %63 = vector.shape_cast %62 : vector<1x8x128xf32> to vector<8x128xf32>
      %64 = vector.shape_cast %49 : vector<8x128xf32> to vector<1x8x128xf32>
      tpu.vector_store %arg6[%c0_26, %c0_27, %c0_28], %64 {strides = array<i32>} : memref<1x8x128xf32, #tpu.memory_space<vmem>>, vector<1x8x128xf32>,
    } else {
    }
    return
  }
  func.func @transform_0(%arg0: i32, %arg1: i32) -> (i32, i32) {
    %c1_i32 = arith.constant 1 : i32
    %0 = arith.muli %arg0, %c1_i32 : i32
    %1 = arith.addi %0, %arg1 : i32
    %c0_i32 = arith.constant 0 : i32
    %2 = arith.minsi %1, %c0_i32 : i32
    %c0_i32_0 = arith.constant 0 : i32
    %c0_i32_1 = arith.constant 0 : i32
    return %2, %c0_i32_0 : i32, i32
  }
  func.func @transform_1(%arg0: i32, %arg1: i32) -> (i32, i32) {
    %c1_i32 = arith.constant 1 : i32
    %0 = arith.muli %arg0, %c1_i32 : i32
    %1 = arith.addi %0, %arg1 : i32
    %c0_i32 = arith.constant 0 : i32
    %2 = arith.minsi %1, %c0_i32 : i32
    %c0_i32_0 = arith.constant 0 : i32
    %c0_i32_1 = arith.constant 0 : i32
    return %2, %c0_i32_0 : i32, i32
  }
  func.func @transform_2(%arg0: i32, %arg1: i32) -> (i32, i32, i32) {
    %c0_i32 = arith.constant 0 : i32
    %c0_i32_0 = arith.constant 0 : i32
    %c0_i32_1 = arith.constant 0 : i32
    return %arg0, %c0_i32, %c0_i32_0 : i32, i32, i32
  }
  func.func @transform_3(%arg0: i32, %arg1: i32) -> (i32, i32, i32) {
    %c0_i32 = arith.constant 0 : i32
    %c0_i32_0 = arith.constant 0 : i32
    %c0_i32_1 = arith.constant 0 : i32
    return %arg0, %c0_i32, %c0_i32_0 : i32, i32, i32
  }
  func.func @transform_4(%arg0: i32, %arg1: i32) -> (i32, i32, i32) {
    %c0_i32 = arith.constant 0 : i32
    %c0_i32_0 = arith.constant 0 : i32
    %c0_i32_1 = arith.constant 0 : i32
    return %arg0, %c0_i32, %c0_i32_0 : i32, i32, i32
  }
  func.func @transform_5(%arg0: i32, %arg1: i32) -> (i32, i32, i32) {
    %c0_i32 = arith.constant 0 : i32
    %c0_i32_0 = arith.constant 0 : i32
    %c0_i32_1 = arith.constant 0 : i32
    return %arg0, %c0_i32, %c0_i32_0 : i32, i32, i32
  }
}

</mosaic_0001>

<llo_original>
// kernel: tpu_custom_call.1
$region0: #{tpu_custom_call.1}
  #allocation0 [shape = 'u32[]', space=smem, size = 0x4, offset = 0x4, fixed_abs, tag = 'smem constant byte address 0x4 - core index']
  #allocation1 [shape = 'u32[72,128]{1,0:T(1,128)}', space=vmem, size = 0x9000, scoped, tag = 'internal scratch']
  %s0 = inlined_call_operand.hbm [shape: f32[8,128], index: 0, kind: input, shape index: {}]
  %s1 = inlined_call_operand.hbm [shape: f32[8,128], index: 1, kind: input, shape index: {}]
  %s2 = inlined_call_operand.hbm [shape: f32[2,8,128], index: 2, kind: output, shape index: {0}]
  %s3 = inlined_call_operand.hbm [shape: f32[2,8,128], index: 3, kind: output, shape index: {1}]
  %s4 = inlined_call_operand.hbm [shape: f32[2,8,128], index: 4, kind: output, shape index: {2}]
  %s5 = inlined_call_operand.hbm [shape: f32[2,8,128], index: 5, kind: output, shape index: {3}]
  %6 = xla_tuple %s2, %s3, %s4, %s5
  %s7 = sld [smem:[#allocation0]]
  $region81: #{tpu_custom_call.1} parent=0
    _
  %s9 = ssub.s32 1, %s7
  %s10 = scalar_select 0, %s9, %s7
  $region1: #{tpu_custom_call.1} parent=0
    #allocation2 [shape = 'u8[8192]{0}', space=vmem, size = 0x2000, scoped, tag = 'input window, operand 0']
    #allocation3 [shape = 's32[2]{0}', space=sflag, size = 0x8, scoped, tag = 'scoped memory for tpu_custom_call.1']
    #allocation4 [shape = 's32[2]{0}', space=sflag, size = 0x8, scoped, tag = 'scoped memory for tpu_custom_call.1']
    #allocation5 [shape = 'u8[8192]{0}', space=vmem, size = 0x2000, scoped, tag = 'input window, operand 1']
    #allocation6 [shape = 's32[2]{0}', space=sflag, size = 0x8, scoped, tag = 'scoped memory for tpu_custom_call.1']
    #allocation7 [shape = 'u8[8192]{0}', space=vmem, size = 0x2000, scoped, tag = 'output window, operand 0']
    #allocation8 [shape = 'u8[8192]{0}', space=vmem, size = 0x2000, scoped, tag = 'output window, operand 1']
    #allocation9 [shape = 's32[2]{0}', space=sflag, size = 0x8, scoped, tag = 'scoped memory for tpu_custom_call.1']
    #allocation10 [shape = 'u8[8192]{0}', space=vmem, size = 0x2000, scoped, tag = 'output window, operand 2']
    #allocation11 [shape = 'u8[8192]{0}', space=vmem, size = 0x2000, scoped, tag = 'output window, operand 3']
    #allocation12 [shape = 's32[2]{0}', space=sflag, size = 0x8, scoped, tag = 'scoped memory for tpu_custom_call.1']
    %11 = vsyncpa [#allocation3], 0
    %s12 = scalar_lea.sflag [#allocation3], 1
    %13 = vsyncpa %s12, 0
    %14 = vsyncpa [#allocation6], 0
    %s15 = scalar_lea.sflag [#allocation6], 1
    %16 = vsyncpa %s15, 0
    %17 = vsyncpa [#allocation4], 0
    %s18 = scalar_lea.sflag [#allocation4], 1
    %19 = vsyncpa %s18, 0
    %20 = vsyncpa [#allocation9], 0
    %s21 = scalar_lea.sflag [#allocation9], 1
    %22 = vsyncpa %s21, 0
    %23 = vsyncpa [#allocation12], 0
    %s24 = scalar_lea.sflag [#allocation12], 1
    %25 = vsyncpa %s24, 0
    loop: start=0, step=1, limit=4
    $region2: #{tpu_custom_call.1} parent=1 // loop_pre_header
      _
    $region3: #{tpu_custom_call.1} parent=1 // loop_header
      %s27 = sphi 0, %s31
      %p28 = scmp.ge.s32.totalorder %s27, 4
      %s34 = sphi 0, %s46
      %s35 = sphi 0, %s42
      %s36 = sphi 0, %s34
      %s37 = sphi 0, %s35
      %s38 = sphi 0, %s36
      %s39 = sphi 0, %s37
      %s55 = sphi 0, %s57
      %s58 = sphi 0, %s55
      %s59 = sphi 0, %s58
      %s75 = sphi 0, %s59
      %s87 = sphi 0, %s89
      %s90 = sphi 0, %s87
      %s91 = sphi 0, %s90
      %s107 = sphi 0, %s91
      %s113 = sphi 0, %s115
      %s116 = sphi 0, %s113
      %s117 = sphi 0, %s116
      %s133 = sphi 0, %s117
      %s139 = sphi 0, %s141
      %s142 = sphi 0, %s139
      %s143 = sphi 0, %s142
      %s159 = sphi 0, %s143
      %s165 = sphi 0, %s167
      %s168 = sphi 0, %s165
      %s169 = sphi 0, %s168
      %s185 = sphi 0, %s169
      %s191 = sphi 0, %s193
      %s194 = sphi 0, %s191
      %s195 = sphi 0, %s194
      %s211 = sphi 0, %s195
    $region4: #{tpu_custom_call.1} parent=1 // loop_header_branch
      %30 = sbr.rel (%p28) target = $region8
    $region5: #{tpu_custom_call.1} parent=1 // loop_body
      %s32 = ssub.s32 %s27, 1
      %s33 = ssub.s32 %s27, 2
      %s40 = sadd.s32 1, %s35
      %p41 = scmp.ge.s32.totalorder %s40, 1
      %s42 = scalar_select %p41, 0, %s40
      %s43 = sadd.s32 1, %s34
      %s44 = scalar_select %p41, %s43, %s34
      %p45 = scmp.ge.s32.totalorder %s44, 2
      %s46 = scalar_select %p45, 0, %s44
      %s47 = sadd.s32 %s34, %s35
      %p48 = scmp.lt.s32.totalorder %s47, 0
      %s49 = scalar_select %p48, %s47, 0
      %s50 = sadd.s32 %s46, %s42
      %p51 = scmp.lt.s32.totalorder %s50, 0
      %s52 = scalar_select %p51, %s50, 0
      %s53 = ssub.s32 %s49, %s52
      %p54 = scmp.eq.s32.totalorder %s53, 0
      %s56 = sadd.s32 %s55, 1
      %s57 = scalar_select %p54, %s55, %s56
      %p60 = pneg %p54
      %p61 = scmp.eq.s32.totalorder %s27, 1
      %p62 = por %p60, %p61
      %p63 = scmp.ne.s32.totalorder %s55, %s58
      %p64 = scmp.eq.s32.totalorder %s27, 0
      %p65 = por %p63, %p64
      %p66 = scmp.ne.s32.totalorder %s55, %s58
      %p67 = scmp.eq.s32.totalorder %s32, 1
      %p68 = por %p66, %p67
      %p69 = scmp.ne.s32.totalorder %s58, %s59
      %p70 = scmp.eq.s32.totalorder %s32, 0
      %p71 = por %p69, %p70
      %p72 = scmp.ne.s32.totalorder %s58, %s59
      %p73 = scmp.eq.s32.totalorder %s33, 1
      %p74 = por %p72, %p73
      %p76 = scmp.ne.s32.totalorder %s59, %s75
      %p77 = scmp.eq.s32.totalorder %s33, 0
      %p78 = por %p76, %p77
      %s79 = sadd.s32 %s34, %s35
      %p80 = scmp.lt.s32.totalorder %s79, 0
      %s81 = scalar_select %p80, %s79, 0
      %s82 = sadd.s32 %s46, %s42
      %p83 = scmp.lt.s32.totalorder %s82, 0
      %s84 = scalar_select %p83, %s82, 0
      %s85 = ssub.s32 %s81, %s84
      %p86 = scmp.eq.s32.totalorder %s85, 0
      %s88 = sadd.s32 %s87, 1
      %s89 = scalar_select %p86, %s87, %s88
      %p92 = pneg %p86
      %p93 = scmp.eq.s32.totalorder %s27, 1
      %p94 = por %p92, %p93
      %p95 = scmp.ne.s32.totalorder %s87, %s90
      %p96 = scmp.eq.s32.totalorder %s27, 0
      %p97 = por %p95, %p96
      %p98 = scmp.ne.s32.totalorder %s87, %s90
      %p99 = scmp.eq.s32.totalorder %s32, 1
      %p100 = por %p98, %p99
      %p101 = scmp.ne.s32.totalorder %s90, %s91
      %p102 = scmp.eq.s32.totalorder %s32, 0
      %p103 = por %p101, %p102
      %p104 = scmp.ne.s32.totalorder %s90, %s91
      %p105 = scmp.eq.s32.totalorder %s33, 1
      %p106 = por %p104, %p105
      %p108 = scmp.ne.s32.totalorder %s91, %s107
      %p109 = scmp.eq.s32.totalorder %s33, 0
      %p110 = por %p108, %p109
      %s111 = ssub.s32 %s34, %s46
      %p112 = scmp.eq.s32.totalorder %s111, 0
      %s114 = sadd.s32 %s113, 1
      %s115 = scalar_select %p112, %s113, %s114
      %p118 = pneg %p112
      %p119 = scmp.eq.s32.totalorder %s27, 1
      %p120 = por %p118, %p119
      %p121 = scmp.ne.s32.totalorder %s113, %s116
      %p122 = scmp.eq.s32.totalorder %s27, 0
      %p123 = por %p121, %p122
      %p124 = scmp.ne.s32.totalorder %s113, %s116
      %p125 = scmp.eq.s32.totalorder %s32, 1
      %p126 = por %p124, %p125
      %p127 = scmp.ne.s32.totalorder %s116, %s117
      %p128 = scmp.eq.s32.totalorder %s32, 0
      %p129 = por %p127, %p128
      %p130 = scmp.ne.s32.totalorder %s116, %s117
      %p131 = scmp.eq.s32.totalorder %s33, 1
      %p132 = por %p130, %p131
      %p134 = scmp.ne.s32.totalorder %s117, %s133
      %p135 = scmp.eq.s32.totalorder %s33, 0
      %p136 = por %p134, %p135
      %s137 = ssub.s32 %s34, %s46
      %p138 = scmp.eq.s32.totalorder %s137, 0
      %s140 = sadd.s32 %s139, 1
      %s141 = scalar_select %p138, %s139, %s140
      %p144 = pneg %p138
      %p145 = scmp.eq.s32.totalorder %s27, 1
      %p146 = por %p144, %p145
      %p147 = scmp.ne.s32.totalorder %s139, %s142
      %p148 = scmp.eq.s32.totalorder %s27, 0
      %p149 = por %p147, %p148
      %p150 = scmp.ne.s32.totalorder %s139, %s142
      %p151 = scmp.eq.s32.totalorder %s32, 1
      %p152 = por %p150, %p151
      %p153 = scmp.ne.s32.totalorder %s142, %s143
      %p154 = scmp.eq.s32.totalorder %s32, 0
      %p155 = por %p153, %p154
      %p156 = scmp.ne.s32.totalorder %s142, %s143
      %p157 = scmp.eq.s32.totalorder %s33, 1
      %p158 = por %p156, %p157
      %p160 = scmp.ne.s32.totalorder %s143, %s159
      %p161 = scmp.eq.s32.totalorder %s33, 0
      %p162 = por %p160, %p161
      %s163 = ssub.s32 %s34, %s46
      %p164 = scmp.eq.s32.totalorder %s163, 0
      %s166 = sadd.s32 %s165, 1
      %s167 = scalar_select %p164, %s165, %s166
      %p170 = pneg %p164
      %p171 = scmp.eq.s32.totalorder %s27, 1
      %p172 = por %p170, %p171
      %p173 = scmp.ne.s32.totalorder %s165, %s168
      %p174 = scmp.eq.s32.totalorder %s27, 0
      %p175 = por %p173, %p174
      %p176 = scmp.ne.s32.totalorder %s165, %s168
      %p177 = scmp.eq.s32.totalorder %s32, 1
      %p178 = por %p176, %p177
      %p179 = scmp.ne.s32.totalorder %s168, %s169
      %p180 = scmp.eq.s32.totalorder %s32, 0
      %p181 = por %p179, %p180
      %p182 = scmp.ne.s32.totalorder %s168, %s169
      %p183 = scmp.eq.s32.totalorder %s33, 1
      %p184 = por %p182, %p183
      %p186 = scmp.ne.s32.totalorder %s169, %s185
      %p187 = scmp.eq.s32.totalorder %s33, 0
      %p188 = por %p186, %p187
      %s189 = ssub.s32 %s34, %s46
      %p190 = scmp.eq.s32.totalorder %s189, 0
      %s192 = sadd.s32 %s191, 1
      %s193 = scalar_select %p190, %s191, %s192
      %p196 = pneg %p190
      %p197 = scmp.eq.s32.totalorder %s27, 1
      %p198 = por %p196, %p197
      %p199 = scmp.ne.s32.totalorder %s191, %s194
      %p200 = scmp.eq.s32.totalorder %s27, 0
      %p201 = por %p199, %p200
      %p202 = scmp.ne.s32.totalorder %s191, %s194
      %p203 = scmp.eq.s32.totalorder %s32, 1
      %p204 = por %p202, %p203
      %p205 = scmp.ne.s32.totalorder %s194, %s195
      %p206 = scmp.eq.s32.totalorder %s32, 0
      %p207 = por %p205, %p206
      %p208 = scmp.ne.s32.totalorder %s194, %s195
      %p209 = scmp.eq.s32.totalorder %s33, 1
      %p210 = por %p208, %p209
      %p212 = scmp.ne.s32.totalorder %s195, %s211
      %p213 = scmp.eq.s32.totalorder %s33, 0
      %p214 = por %p212, %p213
      %p215 = scmp.le.s32.totalorder 1, %s27
      %p216 = scmp.lt.s32.totalorder %s27, 3
      %p217 = pnand %p215, %p216
      %p218 = pneg %p217
      // Predicated region
      $region9: #{tpu_custom_call.1} parent=5 // pred_check
        _
      $region10: #{tpu_custom_call.1} parent=5 // pred_check_branch
        %220 = sbr.rel (%p217) target = $region12
      $region11: #{tpu_custom_call.1} parent=5 // pred_region
        %s221 = ssub.s32 %s27, 1
      $region12: #{tpu_custom_call.1} parent=5 // pred_fallthru
        _
      %p222 = scmp.lt.s32.totalorder %s27, 2
      // Predicated region
      $region13: #{tpu_custom_call.1} parent=5 // pred_check
        %p223 = pneg %p222
      $region14: #{tpu_custom_call.1} parent=5 // pred_check_branch
        %225 = sbr.rel (%p223) target = $region16
      $region15: #{tpu_custom_call.1} parent=5 // pred_region
        // Predicated region
        $region17: #{tpu_custom_call.1} parent=15 // pred_check
          %p226 = pneg %p65
        $region18: #{tpu_custom_call.1} parent=15 // pred_check_branch
          %228 = sbr.rel (%p226) target = $region20
        $region19: #{tpu_custom_call.1} parent=15 // pred_region
          %s229 = sand.u32 %s55, 1
          %s230 = scalar_lea.sflag [#allocation3], %s229
          %s231 = sand.u32 %s55, 1
          %s232 = smul.addr %s231, 8
          %s233 = scalar_lea.vmem [#allocation2], %s232
          %s234 = sadd.s32 %s34, %s35
          %p235 = scmp.lt.s32.totalorder %s234, 0
          %s236 = scalar_select %p235, %s234, 0
          %238 = vsyncadd %s230, 0
          %s239 = smul.addr %s236, 8
          %s240 = scalar_lea.hbm %s0, %s239
          %s242 = sshll.u32 %s240, 4
          %s243 = int_to_ptr.hbm [resolvable:$true] %s242
          %s244 = sshll.u32 %s233, 4
          %s245 = int_to_ptr.vmem [resolvable:$true] %s244
          %247 = dma.hbm_to_vmem [thread:$0]  %s243, 128, %s245, %s230
        $region20: #{tpu_custom_call.1} parent=15 // pred_fallthru
          _
        // Predicated region
        $region21: #{tpu_custom_call.1} parent=15 // pred_check
          %p248 = pneg %p97
        $region22: #{tpu_custom_call.1} parent=15 // pred_check_branch
          %250 = sbr.rel (%p248) target = $region24
        $region23: #{tpu_custom_call.1} parent=15 // pred_region
          %s251 = sand.u32 %s87, 1
          %s252 = scalar_lea.sflag [#allocation6], %s251
          %s253 = sand.u32 %s87, 1
          %s254 = smul.addr %s253, 8
          %s255 = scalar_lea.vmem [#allocation5], %s254
          %s256 = sadd.s32 %s34, %s35
          %p257 = scmp.lt.s32.totalorder %s256, 0
          %s258 = scalar_select %p257, %s256, 0
          %260 = vsyncadd %s252, 0
          %s261 = smul.addr %s258, 8
          %s262 = scalar_lea.hbm %s1, %s261
          %s264 = sshll.u32 %s262, 4
          %s265 = int_to_ptr.hbm [resolvable:$true] %s264
          %s266 = sshll.u32 %s255, 4
          %s267 = int_to_ptr.vmem [resolvable:$true] %s266
          %269 = dma.hbm_to_vmem [thread:$0]  %s265, 128, %s267, %s252
        $region24: #{tpu_custom_call.1} parent=15 // pred_fallthru
          _
      $region16: #{tpu_custom_call.1} parent=5 // pred_fallthru
        _
      %p270 = scmp.le.s32.totalorder 1, %s27
      %p271 = scmp.lt.s32.totalorder %s27, 3
      %p272 = pnand %p270, %p271
      %p273 = pneg %p272
      // Predicated region
      $region25: #{tpu_custom_call.1} parent=5 // pred_check
        _
      $region26: #{tpu_custom_call.1} parent=5 // pred_check_branch
        %275 = sbr.rel (%p272) target = $region28
      $region27: #{tpu_custom_call.1} parent=5 // pred_region
        %s276 = ssub.s32 %s27, 1
        %s277 = sand.u32 %s58, 1
        %s278 = scalar_lea.sflag [#allocation3], %s277
        %s279 = sand.u32 %s58, 1
        %s280 = smul.addr %s279, 8
        %s281 = scalar_lea.vmem [#allocation2], %s280
        // Predicated region
        $region29: #{tpu_custom_call.1} parent=27 // pred_check
          %p282 = pneg %p71
        $region30: #{tpu_custom_call.1} parent=27 // pred_check_branch
          %284 = sbr.rel (%p282) target = $region32
        $region31: #{tpu_custom_call.1} parent=27 // pred_region
          %286 = dma.done %s278, 128
        $region32: #{tpu_custom_call.1} parent=27 // pred_fallthru
          _
        %s287 = sand.u32 %s90, 1
        %s288 = scalar_lea.sflag [#allocation6], %s287
        %s289 = sand.u32 %s90, 1
        %s290 = smul.addr %s289, 8
        %s291 = scalar_lea.vmem [#allocation5], %s290
        // Predicated region
        $region33: #{tpu_custom_call.1} parent=27 // pred_check
          %p292 = pneg %p103
        $region34: #{tpu_custom_call.1} parent=27 // pred_check_branch
          %294 = sbr.rel (%p292) target = $region36
        $region35: #{tpu_custom_call.1} parent=27 // pred_region
          %296 = dma.done %s288, 128
        $region36: #{tpu_custom_call.1} parent=27 // pred_fallthru
          _
        %s297 = sand.u32 %s58, 1
        %s298 = scalar_lea.sflag [#allocation3], %s297
        %s299 = sand.u32 %s58, 1
        %s300 = smul.addr %s299, 8
        %s301 = scalar_lea.vmem [#allocation2], %s300
        %p302 = pneg %p71
        %p303 = pneg %p68
        %s304 = sand.u32 %s90, 1
        %s305 = scalar_lea.sflag [#allocation6], %s304
        %s306 = sand.u32 %s90, 1
        %s307 = smul.addr %s306, 8
        %s308 = scalar_lea.vmem [#allocation5], %s307
        %p309 = pneg %p103
        %p310 = pneg %p100
        %p311 = pneg %p129
        %p312 = pneg %p126
        %s313 = sand.u32 %s116, 1
        %s314 = scalar_lea.sflag [#allocation4], %s313
        %s315 = sand.u32 %s116, 1
        %s316 = smul.addr %s315, 8
        %s317 = scalar_lea.vmem [#allocation7], %s316
        %p318 = pneg %p155
        %p319 = pneg %p152
        %s320 = sand.u32 %s32, 1
        %s321 = scalar_lea.sflag [#allocation9], %s320
        %s322 = sand.u32 %s142, 1
        %s323 = smul.addr %s322, 8
        %s324 = scalar_lea.vmem [#allocation8], %s323
        %p325 = pneg %p181
        %p326 = pneg %p178
        %s327 = sand.u32 %s32, 1
        %s328 = scalar_lea.sflag [#allocation9], %s327
        %s329 = sand.u32 %s168, 1
        %s330 = smul.addr %s329, 8
        %s331 = scalar_lea.vmem [#allocation10], %s330
        %p332 = pneg %p207
        %p333 = pneg %p204
        %s334 = sand.u32 %s194, 1
        %s335 = scalar_lea.sflag [#allocation12], %s334
        %s336 = sand.u32 %s194, 1
        %s337 = smul.addr %s336, 8
        %s338 = scalar_lea.vmem [#allocation11], %s337
        %s339 = sadd.s32 %s36, %s37
        %p340 = scmp.lt.s32.totalorder %s339, 0
        %s341 = scalar_select %p340, %s339, 0
        %s342 = sadd.s32 %s36, %s37
        %p343 = scmp.lt.s32.totalorder %s342, 0
        %s344 = scalar_select %p343, %s342, 0
        %p345 = scmp.eq.s32.totalorder %s37, 0
        // Predicated region
        $region37: #{tpu_custom_call.1} parent=27 // pred_check
          %p346 = pneg %p345
        $region38: #{tpu_custom_call.1} parent=27 // pred_check_branch
          %348 = sbr.rel (%p346) target = $region40
        $region39: #{tpu_custom_call.1} parent=27 // pred_region
          %349 = vst [vmem:[%s317] sm:$0xff] -1e+30
          %350 = vst [vmem:[%s324] sm:$0xff] 0.0
          %351 = vst [vmem:[%s331] sm:$0xff] -1e+30
          %352 = vst [vmem:[%s338] sm:$0xff] 0.0
        $region40: #{tpu_custom_call.1} parent=27 // pred_fallthru
          _
        %s353 = sadd.s32 %s36, %s37
        %p354 = scmp.lt.s32.totalorder %s37, 1
        %p355 = scmp.eq.s32.totalorder %s353, 0
        %p356 = pnand %p354, %p355
        %p357 = pneg %p356
        // Predicated region
        $region41: #{tpu_custom_call.1} parent=27 // pred_check
          _
        $region42: #{tpu_custom_call.1} parent=27 // pred_check_branch
          %359 = sbr.rel (%p356) target = $region44
        $region43: #{tpu_custom_call.1} parent=27 // pred_region
          %v360 = vld [vmem:[%s281] sm:$0xff]
          %v361 = vsub.f32 1.25, %v360
          %v362 = vmax.f32 %v361, 0.0
          %v363 = vsub.f32 0.75, %v360
          %v364 = vmul.f32 %v363, 64.0
          %v365 = vmul.f32 %v362, %v364
          %v366 = vlaneseq
          %v367 = vshrl.u32 %v366, 7
          %vm368 = vcmp.lt.s32.totalorder %v367, 2
          %v369 = vlaneseq
          %v370 = vand.u32 %v369, 127
          %vm371 = vcmp.eq.s32.totalorder %v367, 2
          %vm372 = vcmp.lt.s32.totalorder %v370, 44
          %vm373 = vmand %vm371, %vm372
          %vm374 = vmor %vm368, %vm373
          %v375 = vsel %vm374, %v365, -1e+30
          %v376 = vsub.f32 %v375, %v375
          %v377 = vmul.f32 %v376, 1.442695
          %v378 = vpow.pop %v377
          %v379 = vadd.f32 %v378, 0.0
          %v380 = vld [vmem:[%s317] sm:$0xff]
          %v381 = vmax.f32 %v380, %v375
          %v382 = vld [vmem:[%s324] sm:$0xff]
          %v383 = vsub.f32 %v380, %v381
          %v384 = vmul.f32 %v383, 1.442695
          %v385 = vpow.pop %v384
          %v386 = vmul.f32 %v382, %v385
          %v387 = vsub.f32 %v375, %v381
          %v388 = vmul.f32 %v387, 1.442695
          %v389 = vpow.pop %v388
          %v390 = vmul.f32 %v379, %v389
          %v391 = vadd.f32 %v386, %v390
          %392 = vst [vmem:[%s324] sm:$0xff] %v391
          %393 = vst [vmem:[%s317] sm:$0xff] %v381
          %v394 = vld [vmem:[%s291] sm:$0xff]
          %v395 = vadd.f32 %v394, 0.25
          %v396 = vmax.f32 %v395, 0.0
          %v397 = vsub.f32 %v394, 0.25
          %v398 = vmul.f32 %v397, 64.0
          %v399 = vmul.f32 %v396, %v398
          %vm400 = vcmp.lt.s32.totalorder %v367, 4
          %vm401 = vcmp.eq.s32.totalorder %v367, 4
          %vm402 = vcmp.lt.s32.totalorder %v370, 5
          %vm403 = vmand %vm401, %vm402
          %vm404 = vmor %vm400, %vm403
          %v405 = vsel %vm404, %v399, -1e+30
          %v406 = vsub.f32 %v405, %v405
          %v407 = vmul.f32 %v406, 1.442695
          %v408 = vpow.pop %v407
          %v409 = vadd.f32 %v408, 0.0
          %v410 = vld [vmem:[%s331] sm:$0xff]
          %v411 = vmax.f32 %v410, %v405
          %v412 = vld [vmem:[%s338] sm:$0xff]
          %v413 = vsub.f32 %v410, %v411
          %v414 = vmul.f32 %v413, 1.442695
          %v415 = vpow.pop %v414
          %v416 = vmul.f32 %v412, %v415
          %v417 = vsub.f32 %v405, %v411
          %v418 = vmul.f32 %v417, 1.442695
          %v419 = vpow.pop %v418
          %v420 = vmul.f32 %v409, %v419
          %v421 = vadd.f32 %v416, %v420
          %422 = vst [vmem:[%s338] sm:$0xff] %v421
          %423 = vst [vmem:[%s331] sm:$0xff] %v411
        $region44: #{tpu_custom_call.1} parent=27 // pred_fallthru
          _
        %s424 = sand.u32 %s116, 1
        %s425 = scalar_lea.sflag [#allocation4], %s424
        %s426 = sand.u32 %s116, 1
        %s427 = smul.addr %s426, 8
        %s428 = scalar_lea.vmem [#allocation7], %s427
        %s429 = sand.u32 %s32, 1
        %s430 = scalar_lea.sflag [#allocation9], %s429
        %s431 = sand.u32 %s142, 1
        %s432 = smul.addr %s431, 8
        %s433 = scalar_lea.vmem [#allocation8], %s432
        %s434 = sand.u32 %s32, 1
        %s435 = scalar_lea.sflag [#allocation9], %s434
        %s436 = sand.u32 %s168, 1
        %s437 = smul.addr %s436, 8
        %s438 = scalar_lea.vmem [#allocation10], %s437
        %s439 = sand.u32 %s194, 1
        %s440 = scalar_lea.sflag [#allocation12], %s439
        %s441 = sand.u32 %s194, 1
        %s442 = smul.addr %s441, 8
        %s443 = scalar_lea.vmem [#allocation11], %s442
        // Predicated region
        $region45: #{tpu_custom_call.1} parent=27 // pred_check
          %p444 = pneg %p126
        $region46: #{tpu_custom_call.1} parent=27 // pred_check_branch
          %446 = sbr.rel (%p444) target = $region48
        $region47: #{tpu_custom_call.1} parent=27 // pred_region
          %448 = vsyncadd %s425, 0
          %s449 = smul.addr %s36, 8
          %s450 = scalar_lea.hbm %s2, %s449
          %s452 = sshll.u32 %s428, 4
          %s453 = int_to_ptr.vmem [resolvable:$true] %s452
          %s454 = sshll.u32 %s450, 4
          %s455 = int_to_ptr.hbm [resolvable:$true] %s454
          %457 = dma.vmem_to_hbm [thread:$0]  %s453, 128, %s455, %s425
        $region48: #{tpu_custom_call.1} parent=27 // pred_fallthru
          _
        // Predicated region
        $region49: #{tpu_custom_call.1} parent=27 // pred_check
          %p458 = pneg %p152
        $region50: #{tpu_custom_call.1} parent=27 // pred_check_branch
          %460 = sbr.rel (%p458) target = $region52
        $region51: #{tpu_custom_call.1} parent=27 // pred_region
          %462 = vsyncadd %s430, 0
          %s463 = smul.addr %s36, 8
          %s464 = scalar_lea.hbm %s3, %s463
          %s466 = sshll.u32 %s433, 4
          %s467 = int_to_ptr.vmem [resolvable:$true] %s466
          %s468 = sshll.u32 %s464, 4
          %s469 = int_to_ptr.hbm [resolvable:$true] %s468
          %471 = dma.vmem_to_hbm [thread:$0]  %s467, 128, %s469, %s430
        $region52: #{tpu_custom_call.1} parent=27 // pred_fallthru
          _
        // Predicated region
        $region53: #{tpu_custom_call.1} parent=27 // pred_check
          %p472 = pneg %p178
        $region54: #{tpu_custom_call.1} parent=27 // pred_check_branch
          %474 = sbr.rel (%p472) target = $region56
        $region55: #{tpu_custom_call.1} parent=27 // pred_region
          %476 = vsyncadd %s435, 0
          %s477 = smul.addr %s36, 8
          %s478 = scalar_lea.hbm %s4, %s477
          %s480 = sshll.u32 %s438, 4
          %s481 = int_to_ptr.vmem [resolvable:$true] %s480
          %s482 = sshll.u32 %s478, 4
          %s483 = int_to_ptr.hbm [resolvable:$true] %s482
          %485 = dma.vmem_to_hbm [thread:$0]  %s481, 128, %s483, %s435
        $region56: #{tpu_custom_call.1} parent=27 // pred_fallthru
          _
        // Predicated region
        $region57: #{tpu_custom_call.1} parent=27 // pred_check
          %p486 = pneg %p204
        $region58: #{tpu_custom_call.1} parent=27 // pred_check_branch
          %488 = sbr.rel (%p486) target = $region60
        $region59: #{tpu_custom_call.1} parent=27 // pred_region
          %490 = vsyncadd %s440, 0
          %s491 = smul.addr %s36, 8
          %s492 = scalar_lea.hbm %s5, %s491
          %s494 = sshll.u32 %s443, 4
          %s495 = int_to_ptr.vmem [resolvable:$true] %s494
          %s496 = sshll.u32 %s492, 4
          %s497 = int_to_ptr.hbm [resolvable:$true] %s496
          %499 = dma.vmem_to_hbm [thread:$0]  %s495, 128, %s497, %s440
        $region60: #{tpu_custom_call.1} parent=27 // pred_fallthru
          _
      $region28: #{tpu_custom_call.1} parent=5 // pred_fallthru
        _
      %p500 = scmp.le.s32.totalorder 2, %s27
      // Predicated region
      $region61: #{tpu_custom_call.1} parent=5 // pred_check
        %p501 = pneg %p500
      $region62: #{tpu_custom_call.1} parent=5 // pred_check_branch
        %503 = sbr.rel (%p501) target = $region64
      $region63: #{tpu_custom_call.1} parent=5 // pred_region
        %s504 = ssub.s32 %s27, 2
        // Predicated region
        $region65: #{tpu_custom_call.1} parent=63 // pred_check
          %p505 = pneg %p132
        $region66: #{tpu_custom_call.1} parent=63 // pred_check_branch
          %507 = sbr.rel (%p505) target = $region68
        $region67: #{tpu_custom_call.1} parent=63 // pred_region
          %s508 = sand.u32 %s117, 1
          %s509 = scalar_lea.sflag [#allocation4], %s508
          %s510 = sand.u32 %s117, 1
          %s511 = smul.addr %s510, 8
          %s512 = scalar_lea.vmem [#allocation7], %s511
          %514 = dma.done %s509, 128
        $region68: #{tpu_custom_call.1} parent=63 // pred_fallthru
          _
        // Predicated region
        $region69: #{tpu_custom_call.1} parent=63 // pred_check
          %p515 = pneg %p158
        $region70: #{tpu_custom_call.1} parent=63 // pred_check_branch
          %517 = sbr.rel (%p515) target = $region72
        $region71: #{tpu_custom_call.1} parent=63 // pred_region
          %s518 = sand.u32 %s33, 1
          %s519 = scalar_lea.sflag [#allocation9], %s518
          %s520 = sand.u32 %s143, 1
          %s521 = smul.addr %s520, 8
          %s522 = scalar_lea.vmem [#allocation8], %s521
          %524 = dma.done %s519, 128
        $region72: #{tpu_custom_call.1} parent=63 // pred_fallthru
          _
        // Predicated region
        $region73: #{tpu_custom_call.1} parent=63 // pred_check
          %p525 = pneg %p184
        $region74: #{tpu_custom_call.1} parent=63 // pred_check_branch
          %527 = sbr.rel (%p525) target = $region76
        $region75: #{tpu_custom_call.1} parent=63 // pred_region
          %s528 = sand.u32 %s33, 1
          %s529 = scalar_lea.sflag [#allocation9], %s528
          %s530 = sand.u32 %s169, 1
          %s531 = smul.addr %s530, 8
          %s532 = scalar_lea.vmem [#allocation10], %s531
          %534 = dma.done %s529, 128
        $region76: #{tpu_custom_call.1} parent=63 // pred_fallthru
          _
        // Predicated region
        $region77: #{tpu_custom_call.1} parent=63 // pred_check
          %p535 = pneg %p210
        $region78: #{tpu_custom_call.1} parent=63 // pred_check_branch
          %537 = sbr.rel (%p535) target = $region80
        $region79: #{tpu_custom_call.1} parent=63 // pred_region
          %s538 = sand.u32 %s195, 1
          %s539 = scalar_lea.sflag [#allocation12], %s538
          %s540 = sand.u32 %s195, 1
          %s541 = smul.addr %s540, 8
          %s542 = scalar_lea.vmem [#allocation11], %s541
          %544 = dma.done %s539, 128
        $region80: #{tpu_custom_call.1} parent=63 // pred_fallthru
          _
      $region64: #{tpu_custom_call.1} parent=5 // pred_fallthru
        _
    $region6: #{tpu_custom_call.1} parent=1 // loop_footer
      %s31 = sadd.s32 1, %s27
    $region7: #{tpu_custom_call.1} parent=1 // loop_footer_branch
      %26 = sbr.rel target = $region3
    $region8: #{tpu_custom_call.1} parent=1 // loop_exit
      _
    %545 = vsyncpa [#allocation3], 1
    %s546 = scalar_lea.sflag [#allocation3], 1
    %547 = vsyncpa %s546, 1
    %548 = vsyncpa [#allocation6], 1
    %s549 = scalar_lea.sflag [#allocation6], 1
    %550 = vsyncpa %s549, 1
    %551 = vsyncpa [#allocation4], 1
    %s552 = scalar_lea.sflag [#allocation4], 1
    %553 = vsyncpa %s552, 1
    %554 = vsyncpa [#allocation9], 1
    %s555 = scalar_lea.sflag [#allocation9], 1
    %556 = vsyncpa %s555, 1
    %557 = vsyncpa [#allocation12], 1
    %s558 = scalar_lea.sflag [#allocation12], 1
    %559 = vsyncpa %s558, 1

</llo_original>
